<compile_context>
chip_gen: v7x
topology: tpu7x:2x2x1
jax: 0.10.0
libtpu: 0.0.40
codegen_flags: <defaults>
</compile_context>

<pallas_src>
import functools

import jax
import jax.numpy as jnp
from jax.experimental import pallas as pl
from jax.experimental.pallas import tpu as pltpu


def _round_up(x, m):
    return (x + m - 1) // m * m


def _cdiv(a, b):
    return -(-a // b)


def _apply_activation(x, activation):
    if activation == 'tanh':
        return jnp.tanh(x)
    if activation == 'leakyrelu':               # torch default negative_slope = 0.01
        return jnp.where(x >= 0, x, 0.01 * x)
    return x                                    # matches the "no such activate function" path


# Single-buffering request for VMEM-resident operands (constant index_map).
try:
    _SINGLE_BUFFER = pl.Buffered(1)
except Exception:                               # pragma: no cover
    _SINGLE_BUFFER = None


def _resident_spec(shape, mode):
    if mode is None:
        return pl.BlockSpec(shape, lambda i: (0, 0))
    return pl.BlockSpec(shape, lambda i: (0, 0), pipeline_mode=mode)


def _try_resident_modes(fn):
    """Run fn with single-buffered residents; fall back to double-buffering."""
    if _SINGLE_BUFFER is not None:
        try:
            return fn(_SINGLE_BUFFER)
        except Exception:
            pass
    return fn(None)


def _vmem_capacity_bytes():
    try:
        return int(pltpu.get_tpu_info().vmem_capacity_bytes)
    except Exception:
        return 64 * 1024 * 1024                 # conservative: v7x per-core size


# ----------------------------------------------------------------------------
# Kernel 1: object path (net_o) + hoisted per-object halves of net_r.
# Grid over O tiles; weights / biases resident.
# ----------------------------------------------------------------------------
def _obj_kernel(obj_ref, wo_ref, wrs_ref, wro_ref, bo_ref,
                new_obj_ref, tab_s_ref, tab_o_ref, *, compute_dtype, activation):
    obj = obj_ref[...].astype(compute_dtype)
    new_o = jnp.dot(obj, wo_ref[...], preferred_element_type=jnp.float32) + bo_ref[...]
    new_obj_ref[...] = _apply_activation(new_o, activation).astype(new_obj_ref.dtype)
    # Hoisted subject/object weight matmuls of net_r: computed once per object,
    # gathered per edge in the predicate kernel (T*Din*Dout -> O*Din*Dout FLOPs).
    tab_s_ref[...] = jnp.dot(obj, wrs_ref[...],
                             preferred_element_type=jnp.float32).astype(tab_s_ref.dtype)
    tab_o_ref[...] = jnp.dot(obj, wro_ref[...],
                             preferred_element_type=jnp.float32).astype(tab_o_ref.dtype)


# ----------------------------------------------------------------------------
# Kernel 2: predicate path.  Grid over T tiles; tables / weight / bias resident.
# ----------------------------------------------------------------------------
def _pred_kernel(s_idx_ref, o_idx_ref, pred_ref, tab_s_ref, tab_o_ref,
                 wrp_ref, br_ref, new_pred_ref, *, compute_dtype, activation):
    cd = compute_dtype
    t_tile = pred_ref.shape[0]
    n_obj = tab_s_ref.shape[0]

    # Exact row gather of the per-object tables as a 0/1 one-hot matmul in the
    # compute dtype (each one-hot row selects exactly one table row).
    # TODO(synk): replace with a real dynamic row gather (scalar-prefetched
    # indices + dynamic_gather / per-row DMA) to drop the O(T*O*Dout) MXU FLOPs.
    col = jax.lax.broadcasted_iota(jnp.int32, (t_tile, n_obj), 1)
    s_oh = (col == s_idx_ref[...]).astype(cd)            # (T_TILE, O_pad)
    o_oh = (col == o_idx_ref[...]).astype(cd)

    new_p = (jnp.dot(s_oh, tab_s_ref[...], preferred_element_type=jnp.float32)
             + jnp.dot(o_oh, tab_o_ref[...], preferred_element_type=jnp.float32)
             + jnp.dot(pred_ref[...].astype(cd), wrp_ref[...],
                       preferred_element_type=jnp.float32)
             + br_ref[...])
    new_pred_ref[...] = _apply_activation(new_p, activation).astype(new_pred_ref.dtype)


# ----------------------------------------------------------------------------
# Wrapper
# ----------------------------------------------------------------------------
def graph_triple_conv(obj_vecs, pred_vecs, edges, params, *,
                      activation='none',
                      compute_dtype=jnp.bfloat16,
                      out_dtype=None,
                      t_tile_cap=512, o_tile_cap=512,
                      vmem_budget_bytes=None):
    """Pallas implementation of GraphTripleConv.forward.

    Edge indices are assumed to satisfy 0 <= idx < O (as in the PyTorch module).
    """
    O, din = obj_vecs.shape
    T = pred_vecs.shape[0]
    w_r, b_r, w_o, b_o = params['w_r'], params['b_r'], params['w_o'], params['b_o']
    dout = w_o.shape[1]
    out_dtype = obj_vecs.dtype if out_dtype is None else jnp.dtype(out_dtype)
    cd_bytes = jnp.dtype(compute_dtype).itemsize

    # VMEM budgeting: leave headroom under the per-core capacity
    # (v7x: 64 MiB -> ~48 MiB limit; v5e/v6e: 128 MiB -> ~96 MiB limit).
    vmem_cap = _vmem_capacity_bytes()
    vmem_limit = min(int(0.75 * vmem_cap), 100 * 1024 * 1024)
    if vmem_budget_bytes is None:
        vmem_budget_bytes = int(0.8 * vmem_limit)

    # Lane/K-dense padding: both feature dims padded to multiples of 128.
    din_p = _round_up(din, 128)
    dout_p = _round_up(dout, 128)

    def pad_w(w):
        r, c = w.shape
        return jnp.pad(w.astype(jnp.float32),
                       ((0, din_p - r), (0, dout_p - c))).astype(compute_dtype)

    # Split net_r's weight into its three Din-row blocks in the wrapper.
    w_rs = pad_w(w_r[:din])
    w_rp = pad_w(w_r[din:2 * din])
    w_ro = pad_w(w_r[2 * din:])
    w_o_p = pad_w(w_o)
    b_r_p = jnp.pad(b_r.reshape(1, dout).astype(jnp.float32), ((0, 0), (0, dout_p - dout)))
    b_o_p = jnp.pad(b_o.reshape(1, dout).astype(jnp.float32), ((0, 0), (0, dout_p - dout)))

    # Balanced row tiles; >=2 grid steps whenever possible so the "parallel"
    # axis shards across both TensorCores on v7x, and padding waste stays low.
    def balanced_tile(n, cap):
        n = max(n, 1)
        steps = max(2, _cdiv(n, cap))
        tile = _round_up(_cdiv(n, steps), 8)
        return min(tile, _round_up(n, 8))

    # ---- object-path tile (also produces the gather tables) -----------------
    o_tile = balanced_tile(O, o_tile_cap)

    def obj_vmem_bytes(tile):
        resident = 3 * din_p * dout_p * cd_bytes + dout_p * 4
        per_tile = tile * (din_p * 4 + dout_p * 4 + 2 * dout_p * cd_bytes)
        temps = tile * (din_p * cd_bytes + 4 * dout_p * 4)
        return 2 * (resident + per_tile) + temps        # worst case: all double-buffered

    while o_tile > 8 and obj_vmem_bytes(o_tile) > vmem_budget_bytes:
        o_tile = max(8, _round_up(o_tile // 2, 8))
    o_pad = _round_up(O, o_tile)

    # ---- predicate-path tile -------------------------------------------------
    t_tile = balanced_tile(T, t_tile_cap)

    def pred_vmem_bytes(tile):
        resident = (2 * o_pad * dout_p * cd_bytes        # tab_s, tab_o
                    + din_p * dout_p * cd_bytes          # w_rp
                    + dout_p * 4)                        # b_r
        per_tile = tile * (din_p * 4 + 2 * 4 + dout_p * 4)
        temps = tile * (o_pad * (4 + 2 * cd_bytes)       # iota + two one-hots
                        + din_p * cd_bytes               # pred cast
                        + 4 * dout_p * 4)                # f32 partials / accumulator
        return 2 * (resident + per_tile) + temps         # worst case: all double-buffered

    while t_tile > 8 and pred_vmem_bytes(t_tile) > vmem_budget_bytes:
        t_tile = max(8, _round_up(t_tile // 2, 8))
    t_pad = _round_up(T, t_tile)

    # Pad rows (padded index rows are 0 -> valid gather; padded outputs sliced off)
    # and pad the K dim with zero columns (numerically neutral).
    obj_p = jnp.pad(obj_vecs.astype(jnp.float32), ((0, o_pad - O), (0, din_p - din)))
    pred_p = jnp.pad(pred_vecs.astype(jnp.float32), ((0, t_pad - T), (0, din_p - din)))
    s_idx = jnp.pad(edges[:, 0].astype(jnp.int32), (0, t_pad - T)).reshape(t_pad, 1)
    o_idx = jnp.pad(edges[:, 1].astype(jnp.int32), (0, t_pad - T)).reshape(t_pad, 1)

    rowmap = lambda i: (i, 0)
    grid_o = o_pad // o_tile
    grid_t = t_pad // t_tile

    # ---- object path (net_o + hoisted tables) --------------------------------
    obj_flops = 6 * o_pad * din_p * dout_p
    obj_trans = o_pad * dout_p if activation == 'tanh' else 0
    obj_bytes = (o_pad * din_p * 4 + 3 * din_p * dout_p * cd_bytes + 2 * dout_p * 4
                 + o_pad * dout_p * (4 + 2 * cd_bytes))

    def run_obj(mode):
        return pl.pallas_call(
            functools.partial(_obj_kernel, compute_dtype=compute_dtype,
                              activation=activation),
            out_shape=(jax.ShapeDtypeStruct((o_pad, dout_p), out_dtype),
                       jax.ShapeDtypeStruct((o_pad, dout_p), compute_dtype),
                       jax.ShapeDtypeStruct((o_pad, dout_p), compute_dtype)),
            grid=(grid_o,),
            in_specs=[
                pl.BlockSpec((o_tile, din_p), rowmap),       # obj tile
                _resident_spec((din_p, dout_p), mode),       # w_o
                _resident_spec((din_p, dout_p), mode),       # w_r[:Din]
                _resident_spec((din_p, dout_p), mode),       # w_r[2Din:]
                _resident_spec((1, dout_p), mode),           # b_o
            ],
            out_specs=(pl.BlockSpec((o_tile, dout_p), rowmap),
                       pl.BlockSpec((o_tile, dout_p), rowmap),
                       pl.BlockSpec((o_tile, dout_p), rowmap)),
            compiler_params=pltpu.CompilerParams(
                dimension_semantics=("parallel",),
                vmem_limit_bytes=vmem_limit),
            cost_estimate=pl.CostEstimate(flops=obj_flops,
                                          transcendentals=obj_trans,
                                          bytes_accessed=obj_bytes),
        )(obj_p, w_o_p, w_rs, w_ro, b_o_p)

    new_obj_p, tab_s, tab_o = _try_resident_modes(run_obj)

    # ---- predicate path -------------------------------------------------------
    pred_flops = 4 * t_pad * o_pad * dout_p + 2 * t_pad * din_p * dout_p
    pred_trans = t_pad * dout_p if activation == 'tanh' else 0
    pred_bytes = (t_pad * (2 * 4 + din_p * 4 + dout_p * 4)
                  + 2 * o_pad * dout_p * cd_bytes
                  + din_p * dout_p * cd_bytes + dout_p * 4)

    def run_pred(mode):
        return pl.pallas_call(
            functools.partial(_pred_kernel, compute_dtype=compute_dtype,
                              activation=activation),
            out_shape=jax.ShapeDtypeStruct((t_pad, dout_p), out_dtype),
            grid=(grid_t,),
            in_specs=[
                pl.BlockSpec((t_tile, 1), rowmap),           # s_idx
                pl.BlockSpec((t_tile, 1), rowmap),           # o_idx
                pl.BlockSpec((t_tile, din_p), rowmap),       # pred tile
                _resident_spec((o_pad, dout_p), mode),       # tab_s (resident)
                _resident_spec((o_pad, dout_p), mode),       # tab_o (resident)
                _resident_spec((din_p, dout_p), mode),       # w_r[Din:2Din]
                _resident_spec((1, dout_p), mode),           # b_r
            ],
            out_specs=pl.BlockSpec((t_tile, dout_p), rowmap),
            compiler_params=pltpu.CompilerParams(
                dimension_semantics=("parallel",),
                vmem_limit_bytes=vmem_limit),
            cost_estimate=pl.CostEstimate(flops=pred_flops,
                                          transcendentals=pred_trans,
                                          bytes_accessed=pred_bytes),
        )(s_idx, o_idx, pred_p, tab_s, tab_o, w_rp, b_r_p)

    new_pred_p = _try_resident_modes(run_pred)

    return new_obj_p[:O, :dout], new_pred_p[:T, :dout]


# ----------------------------------------------------------------------------
# Params / reference / test
# ----------------------------------------------------------------------------
def init_params(key, input_dim, output_dim):
    """Deterministic parameter init matching nn.Linear's U(-1/sqrt(fan_in), .)."""
    k1, k2, k3, k4 = jax.random.split(key, 4)
    bound_r = 1.0 / float(jnp.sqrt(jnp.float32(3 * input_dim)))
    bound_o = 1.0 / float(jnp.sqrt(jnp.float32(input_dim)))
    return dict(
        w_r=jax.random.uniform(k1, (3 * input_dim, output_dim), jnp.float32,
                               -bound_r, bound_r),
        b_r=jax.random.uniform(k2, (output_dim,), jnp.float32, -bound_r, bound_r),
        w_o=jax.random.uniform(k3, (input_dim, output_dim), jnp.float32,
                               -bound_o, bound_o),
        b_o=jax.random.uniform(k4, (output_dim,), jnp.float32, -bound_o, bound_o),
    )


def reference(obj_vecs, pred_vecs, edges, params, activation):
    """Pure-JAX reference mirroring the PyTorch forward."""
    s = obj_vecs[edges[:, 0]]
    o = obj_vecs[edges[:, 1]]
    t = jnp.concatenate([s, pred_vecs, o], axis=1)
    new_p = jnp.dot(t, params['w_r'], precision='highest') + params['b_r']
    new_o = jnp.dot(obj_vecs, params['w_o'], precision='highest') + params['b_o']
    if activation == 'tanh':
        new_p, new_o = jnp.tanh(new_p), jnp.tanh(new_o)
    elif activation == 'leakyrelu':
        new_p = jnp.where(new_p >= 0, new_p, 0.01 * new_p)
        new_o = jnp.where(new_o >= 0, new_o, 0.01 * new_o)
    return new_o, new_p


if __name__ == "__main__":
    key = jax.random.PRNGKey(0)
    k_obj, k_pred, k_edges, k_params = jax.random.split(key, 4)

    O, T, Din = 8, 16, 64
    Dout = Din                      # output_dim=None -> output_dim = input_dim
    activation = 'tanh'

    obj_vecs = jax.random.normal(k_obj, (O, Din), jnp.float32)
    pred_vecs = jax.random.normal(k_pred, (T, Din), jnp.float32)
    edges = jax.random.randint(k_edges, (T, 2), 0, O, dtype=jnp.int32)
    params = init_params(k_params, Din, Dout)

    ref_obj, ref_pred = reference(obj_vecs, pred_vecs, edges, params, activation)

    # f32 compute path: tight check against the reference.
    new_obj, new_pred = graph_triple_conv(obj_vecs, pred_vecs, edges, params,
                                          activation=activation,
                                          compute_dtype=jnp.float32)
    jax.block_until_ready((new_obj, new_pred))
    assert new_obj.shape == (O, Dout) and new_pred.shape == (T, Dout)
    assert jnp.allclose(new_obj, ref_obj, atol=2e-4, rtol=2e-4)
    assert jnp.allclose(new_pred, ref_pred, atol=2e-4, rtol=2e-4)

    # bf16 compute path (default, MXU-native): loose check.
    new_obj_bf, new_pred_bf = graph_triple_conv(obj_vecs, pred_vecs, edges, params,
                                                activation=activation,
                                                compute_dtype=jnp.bfloat16)
    jax.block_until_ready((new_obj_bf, new_pred_bf))
    assert jnp.allclose(new_obj_bf, ref_obj, atol=5e-2, rtol=5e-2)
    assert jnp.allclose(new_pred_bf, ref_pred, atol=5e-2, rtol=5e-2)

    print("KERNEL_OK")
</pallas_src>

<mosaic_0001>
module attributes {stable_mosaic.version = 11 : i64} {
  func.func @_obj_kernel(%arg0: i32, %arg1: memref<8x128xf32, #tpu.memory_space<vmem>>, %arg2: memref<128x128xf32, #tpu.memory_space<vmem>>, %arg3: memref<128x128xf32, #tpu.memory_space<vmem>>, %arg4: memref<128x128xf32, #tpu.memory_space<vmem>>, %arg5: memref<1x128xf32, #tpu.memory_space<vmem>>, %arg6: memref<8x128xf32, #tpu.memory_space<vmem>>, %arg7: memref<8x128xf32, #tpu.memory_space<vmem>>, %arg8: memref<8x128xf32, #tpu.memory_space<vmem>>) attributes {dimension_semantics = [#tpu.dimension_semantics<parallel>], iteration_bounds = array<i64: 1>, scalar_prefetch = 0 : i64, scratch_operands = 0 : i64, tpu.core_type = #tpu.core_type<tc>, window_params = [{transform_indices = @transform_0, window_bounds = array<i64: 8, 128>}, {pipeline_mode = #tpu.pipeline_mode<synchronous>, transform_indices = @transform_1, window_bounds = array<i64: 128, 128>}, {pipeline_mode = #tpu.pipeline_mode<synchronous>, transform_indices = @transform_2, window_bounds = array<i64: 128, 128>}, {pipeline_mode = #tpu.pipeline_mode<synchronous>, transform_indices = @transform_3, window_bounds = array<i64: 128, 128>}, {pipeline_mode = #tpu.pipeline_mode<synchronous>, transform_indices = @transform_4, window_bounds = array<i64: 1, 128>}, {transform_indices = @transform_5, window_bounds = array<i64: 8, 128>}, {transform_indices = @transform_6, window_bounds = array<i64: 8, 128>}, {transform_indices = @transform_7, window_bounds = array<i64: 8, 128>}]} {
    %c0 = arith.constant 0 : index
    %c0_0 = arith.constant 0 : index
    %0 = vector.load %arg1[%c0, %c0_0] : memref<8x128xf32, #tpu.memory_space<vmem>>, vector<8x128xf32>
    %c0_1 = arith.constant 0 : index
    %c0_2 = arith.constant 0 : index
    %1 = vector.load %arg2[%c0_1, %c0_2] : memref<128x128xf32, #tpu.memory_space<vmem>>, vector<128x128xf32>
    %cst = arith.constant dense<0.000000e+00> : vector<8x128xf32>
    %2 = tpu.matmul %0, %1, %cst {dimension_numbers = #tpu.dot_dimension_numbers<[1], [0], [0], [1], [0, 0, 1, 1], [], []>} : vector<8x128xf32>, vector<128x128xf32>, vector<8x128xf32> -> vector<8x128xf32>
    %c0_3 = arith.constant 0 : index
    %c0_4 = arith.constant 0 : index
    %3 = vector.load %arg5[%c0_3, %c0_4] : memref<1x128xf32, #tpu.memory_space<vmem>>, vector<1x128xf32>
    %4 = vector.broadcast %3 : vector<1x128xf32> to vector<8x128xf32>
    %5 = arith.addf %2, %4 : vector<8x128xf32>
    %6 = math.tanh %5 : vector<8x128xf32>
    %c0_5 = arith.constant 0 : index
    %c0_6 = arith.constant 0 : index
    %7 = vector.load %arg6[%c0_5, %c0_6] : memref<8x128xf32, #tpu.memory_space<vmem>>, vector<8x128xf32>
    tpu.vector_store %arg6[%c0_5, %c0_6], %6 {strides = array<i32>} : memref<8x128xf32, #tpu.memory_space<vmem>>, vector<8x128xf32>,
    %c0_7 = arith.constant 0 : index
    %c0_8 = arith.constant 0 : index
    %8 = vector.load %arg3[%c0_7, %c0_8] : memref<128x128xf32, #tpu.memory_space<vmem>>, vector<128x128xf32>
    %cst_9 = arith.constant dense<0.000000e+00> : vector<8x128xf32>
    %9 = tpu.matmul %0, %8, %cst_9 {dimension_numbers = #tpu.dot_dimension_numbers<[1], [0], [0], [1], [0, 0, 1, 1], [], []>} : vector<8x128xf32>, vector<128x128xf32>, vector<8x128xf32> -> vector<8x128xf32>
    %c0_10 = arith.constant 0 : index
    %c0_11 = arith.constant 0 : index
    %10 = vector.load %arg7[%c0_10, %c0_11] : memref<8x128xf32, #tpu.memory_space<vmem>>, vector<8x128xf32>
    tpu.vector_store %arg7[%c0_10, %c0_11], %9 {strides = array<i32>} : memref<8x128xf32, #tpu.memory_space<vmem>>, vector<8x128xf32>,
    %c0_12 = arith.constant 0 : index
    %c0_13 = arith.constant 0 : index
    %11 = vector.load %arg4[%c0_12, %c0_13] : memref<128x128xf32, #tpu.memory_space<vmem>>, vector<128x128xf32>
    %cst_14 = arith.constant dense<0.000000e+00> : vector<8x128xf32>
    %12 = tpu.matmul %0, %11, %cst_14 {dimension_numbers = #tpu.dot_dimension_numbers<[1], [0], [0], [1], [0, 0, 1, 1], [], []>} : vector<8x128xf32>, vector<128x128xf32>, vector<8x128xf32> -> vector<8x128xf32>
    %c0_15 = arith.constant 0 : index
    %c0_16 = arith.constant 0 : index
    %13 = vector.load %arg8[%c0_15, %c0_16] : memref<8x128xf32, #tpu.memory_space<vmem>>, vector<8x128xf32>
    tpu.vector_store %arg8[%c0_15, %c0_16], %12 {strides = array<i32>} : memref<8x128xf32, #tpu.memory_space<vmem>>, vector<8x128xf32>,
    return
  }
  func.func @transform_0(%arg0: i32) -> (i32, i32) {
    %c0_i32 = arith.constant 0 : i32
    %c0_i32_0 = arith.constant 0 : i32
    return %arg0, %c0_i32 : i32, i32
  }
  func.func @transform_1(%arg0: i32) -> (i32, i32) {
    %c0_i32 = arith.constant 0 : i32
    %c0_i32_0 = arith.constant 0 : i32
    %c0_i32_1 = arith.constant 0 : i32
    return %c0_i32, %c0_i32_0 : i32, i32
  }
  func.func @transform_2(%arg0: i32) -> (i32, i32) {
    %c0_i32 = arith.constant 0 : i32
    %c0_i32_0 = arith.constant 0 : i32
    %c0_i32_1 = arith.constant 0 : i32
    return %c0_i32, %c0_i32_0 : i32, i32
  }
  func.func @transform_3(%arg0: i32) -> (i32, i32) {
    %c0_i32 = arith.constant 0 : i32
    %c0_i32_0 = arith.constant 0 : i32
    %c0_i32_1 = arith.constant 0 : i32
    return %c0_i32, %c0_i32_0 : i32, i32
  }
  func.func @transform_4(%arg0: i32) -> (i32, i32) {
    %c0_i32 = arith.constant 0 : i32
    %c0_i32_0 = arith.constant 0 : i32
    %c0_i32_1 = arith.constant 0 : i32
    return %c0_i32, %c0_i32_0 : i32, i32
  }
  func.func @transform_5(%arg0: i32) -> (i32, i32) {
    %c0_i32 = arith.constant 0 : i32
    %c0_i32_0 = arith.constant 0 : i32
    return %arg0, %c0_i32 : i32, i32
  }
  func.func @transform_6(%arg0: i32) -> (i32, i32) {
    %c0_i32 = arith.constant 0 : i32
    %c0_i32_0 = arith.constant 0 : i32
    return %arg0, %c0_i32 : i32, i32
  }
  func.func @transform_7(%arg0: i32) -> (i32, i32) {
    %c0_i32 = arith.constant 0 : i32
    %c0_i32_0 = arith.constant 0 : i32
    return %arg0, %c0_i32 : i32, i32
  }
}

module attributes {stable_mosaic.version = 11 : i64} {
  func.func @_obj_kernel(%arg0: i32, %arg1: memref<8x128xf32, #tpu.memory_space<vmem>>, %arg2: memref<128x128xf32, #tpu.memory_space<vmem>>, %arg3: memref<128x128xf32, #tpu.memory_space<vmem>>, %arg4: memref<128x128xf32, #tpu.memory_space<vmem>>, %arg5: memref<1x128xf32, #tpu.memory_space<vmem>>, %arg6: memref<8x128xf32, #tpu.memory_space<vmem>>, %arg7: memref<8x128xf32, #tpu.memory_space<vmem>>, %arg8: memref<8x128xf32, #tpu.memory_space<vmem>>) attributes {dimension_semantics = [#tpu.dimension_semantics<parallel>], iteration_bounds = array<i64: 1>, scalar_prefetch = 0 : i64, scratch_operands = 0 : i64, tpu.core_type = #tpu.core_type<tc>, window_params = [{transform_indices = @transform_0, window_bounds = array<i64: 8, 128>}, {pipeline_mode = #tpu.pipeline_mode<synchronous>, transform_indices = @transform_1, window_bounds = array<i64: 128, 128>}, {pipeline_mode = #tpu.pipeline_mode<synchronous>, transform_indices = @transform_2, window_bounds = array<i64: 128, 128>}, {pipeline_mode = #tpu.pipeline_mode<synchronous>, transform_indices = @transform_3, window_bounds = array<i64: 128, 128>}, {pipeline_mode = #tpu.pipeline_mode<synchronous>, transform_indices = @transform_4, window_bounds = array<i64: 1, 128>}, {transform_indices = @transform_5, window_bounds = array<i64: 8, 128>}, {transform_indices = @transform_6, window_bounds = array<i64: 8, 128>}, {transform_indices = @transform_7, window_bounds = array<i64: 8, 128>}]} {
    %c0 = arith.constant 0 : index
    %c0_0 = arith.constant 0 : index
    %0 = vector.load %arg1[%c0, %c0_0] : memref<8x128xf32, #tpu.memory_space<vmem>>, vector<8x128xf32>
    %c0_1 = arith.constant 0 : index
    %c0_2 = arith.constant 0 : index
    %1 = vector.load %arg2[%c0_1, %c0_2] : memref<128x128xf32, #tpu.memory_space<vmem>>, vector<128x128xf32>
    %cst = arith.constant dense<0.000000e+00> : vector<8x128xf32>
    %2 = tpu.matmul %0, %1, %cst {dimension_numbers = #tpu.dot_dimension_numbers<[1], [0], [0], [1], [0, 0, 1, 1], [], []>} : vector<8x128xf32>, vector<128x128xf32>, vector<8x128xf32> -> vector<8x128xf32>
    %c0_3 = arith.constant 0 : index
    %c0_4 = arith.constant 0 : index
    %3 = vector.load %arg5[%c0_3, %c0_4] : memref<1x128xf32, #tpu.memory_space<vmem>>, vector<1x128xf32>
    %4 = vector.broadcast %3 : vector<1x128xf32> to vector<8x128xf32>
    %5 = arith.addf %2, %4 : vector<8x128xf32>
    %6 = math.tanh %5 : vector<8x128xf32>
    %c0_5 = arith.constant 0 : index
    %c0_6 = arith.constant 0 : index
    %7 = vector.load %arg6[%c0_5, %c0_6] : memref<8x128xf32, #tpu.memory_space<vmem>>, vector<8x128xf32>
    tpu.vector_store %arg6[%c0_5, %c0_6], %6 {strides = array<i32>} : memref<8x128xf32, #tpu.memory_space<vmem>>, vector<8x128xf32>,
    %c0_7 = arith.constant 0 : index
    %c0_8 = arith.constant 0 : index
    %8 = vector.load %arg3[%c0_7, %c0_8] : memref<128x128xf32, #tpu.memory_space<vmem>>, vector<128x128xf32>
    %cst_9 = arith.constant dense<0.000000e+00> : vector<8x128xf32>
    %9 = tpu.matmul %0, %8, %cst_9 {dimension_numbers = #tpu.dot_dimension_numbers<[1], [0], [0], [1], [0, 0, 1, 1], [], []>} : vector<8x128xf32>, vector<128x128xf32>, vector<8x128xf32> -> vector<8x128xf32>
    %c0_10 = arith.constant 0 : index
    %c0_11 = arith.constant 0 : index
    %10 = vector.load %arg7[%c0_10, %c0_11] : memref<8x128xf32, #tpu.memory_space<vmem>>, vector<8x128xf32>
    tpu.vector_store %arg7[%c0_10, %c0_11], %9 {strides = array<i32>} : memref<8x128xf32, #tpu.memory_space<vmem>>, vector<8x128xf32>,
    %c0_12 = arith.constant 0 : index
    %c0_13 = arith.constant 0 : index
    %11 = vector.load %arg4[%c0_12, %c0_13] : memref<128x128xf32, #tpu.memory_space<vmem>>, vector<128x128xf32>
    %cst_14 = arith.constant dense<0.000000e+00> : vector<8x128xf32>
    %12 = tpu.matmul %0, %11, %cst_14 {dimension_numbers = #tpu.dot_dimension_numbers<[1], [0], [0], [1], [0, 0, 1, 1], [], []>} : vector<8x128xf32>, vector<128x128xf32>, vector<8x128xf32> -> vector<8x128xf32>
    %c0_15 = arith.constant 0 : index
    %c0_16 = arith.constant 0 : index
    %13 = vector.load %arg8[%c0_15, %c0_16] : memref<8x128xf32, #tpu.memory_space<vmem>>, vector<8x128xf32>
    tpu.vector_store %arg8[%c0_15, %c0_16], %12 {strides = array<i32>} : memref<8x128xf32, #tpu.memory_space<vmem>>, vector<8x128xf32>,
    return
  }
  func.func @transform_0(%arg0: i32) -> (i32, i32) {
    %c0_i32 = arith.constant 0 : i32
    %c0_i32_0 = arith.constant 0 : i32
    return %arg0, %c0_i32 : i32, i32
  }
  func.func @transform_1(%arg0: i32) -> (i32, i32) {
    %c0_i32 = arith.constant 0 : i32
    %c0_i32_0 = arith.constant 0 : i32
    %c0_i32_1 = arith.constant 0 : i32
    return %c0_i32, %c0_i32_0 : i32, i32
  }
  func.func @transform_2(%arg0: i32) -> (i32, i32) {
    %c0_i32 = arith.constant 0 : i32
    %c0_i32_0 = arith.constant 0 : i32
    %c0_i32_1 = arith.constant 0 : i32
    return %c0_i32, %c0_i32_0 : i32, i32
  }
  func.func @transform_3(%arg0: i32) -> (i32, i32) {
    %c0_i32 = arith.constant 0 : i32
    %c0_i32_0 = arith.constant 0 : i32
    %c0_i32_1 = arith.constant 0 : i32
    return %c0_i32, %c0_i32_0 : i32, i32
  }
  func.func @transform_4(%arg0: i32) -> (i32, i32) {
    %c0_i32 = arith.constant 0 : i32
    %c0_i32_0 = arith.constant 0 : i32
    %c0_i32_1 = arith.constant 0 : i32
    return %c0_i32, %c0_i32_0 : i32, i32
  }
  func.func @transform_5(%arg0: i32) -> (i32, i32) {
    %c0_i32 = arith.constant 0 : i32
    %c0_i32_0 = arith.constant 0 : i32
    return %arg0, %c0_i32 : i32, i32
  }
  func.func @transform_6(%arg0: i32) -> (i32, i32) {
    %c0_i32 = arith.constant 0 : i32
    %c0_i32_0 = arith.constant 0 : i32
    return %arg0, %c0_i32 : i32, i32
  }
  func.func @transform_7(%arg0: i32) -> (i32, i32) {
    %c0_i32 = arith.constant 0 : i32
    %c0_i32_0 = arith.constant 0 : i32
    return %arg0, %c0_i32 : i32, i32
  }
}

</mosaic_0001>

<llo_original>
// kernel: tpu_custom_call.1
$region0: #{tpu_custom_call.1}
  #allocation0 [shape = 'u32[]', space=smem, size = 0x4, offset = 0x4, fixed_abs, tag = 'smem constant byte address 0x4 - core index']
  #allocation1 [shape = 'u32[144,128]{1,0:T(1,128)}', space=vmem, size = 0x12000, scoped, tag = 'internal scratch']
  %s0 = inlined_call_operand.hbm [shape: f32[8,128], index: 0, kind: input, shape index: {}]
  %s1 = inlined_call_operand.hbm [shape: f32[128,128], index: 1, kind: input, shape index: {}]
  %s2 = inlined_call_operand.hbm [shape: f32[128,128], index: 2, kind: input, shape index: {}]
  %s3 = inlined_call_operand.hbm [shape: f32[128,128], index: 3, kind: input, shape index: {}]
  %s4 = inlined_call_operand.vmem [shape: f32[1,128], index: 4, kind: input, shape index: {}]
  %s5 = inlined_call_operand.hbm [shape: f32[8,128], index: 5, kind: output, shape index: {0}]
  %s6 = inlined_call_operand.hbm [shape: f32[8,128], index: 6, kind: output, shape index: {1}]
  %s7 = inlined_call_operand.hbm [shape: f32[8,128], index: 7, kind: output, shape index: {2}]
  %8 = xla_tuple %s5, %s6, %s7
  %s9 = sld [smem:[#allocation0]]
  $region62: #{tpu_custom_call.1} parent=0
    _
  %s11 = ssub.s32 1, %s9
  %s12 = scalar_select 0, %s11, %s9
  $region1: #{tpu_custom_call.1} parent=0
    #allocation2 [shape = 'u8[4096]{0}', space=vmem, size = 0x1000, scoped, tag = 'input window, operand 0, single buffered']
    #allocation3 [shape = 's32[1]{0}', space=sflag, size = 0x4, scoped, tag = 'scoped memory for tpu_custom_call.1']
    #allocation4 [shape = 's32[1]{0}', space=sflag, size = 0x4, scoped, tag = 'scoped memory for tpu_custom_call.1']
    #allocation5 [shape = 'u8[65536]{0}', space=vmem, size = 0x10000, scoped, tag = 'input window, operand 1, single buffered']
    #allocation6 [shape = 's32[1]{0}', space=sflag, size = 0x4, scoped, tag = 'scoped memory for tpu_custom_call.1']
    #allocation7 [shape = 'u8[65536]{0}', space=vmem, size = 0x10000, scoped, tag = 'input window, operand 2, single buffered']
    #allocation8 [shape = 'u8[65536]{0}', space=vmem, size = 0x10000, scoped, tag = 'input window, operand 3, single buffered']
    #allocation9 [shape = 's32[1]{0}', space=sflag, size = 0x4, scoped, tag = 'scoped memory for tpu_custom_call.1']
    #allocation10 [shape = 'u8[4096]{0}', space=vmem, size = 0x1000, scoped, tag = 'output window, operand 0, single buffered']
    #allocation11 [shape = 'u8[4096]{0}', space=vmem, size = 0x1000, scoped, tag = 'output window, operand 1, single buffered']
    #allocation12 [shape = 's32[1]{0}', space=sflag, size = 0x4, scoped, tag = 'scoped memory for tpu_custom_call.1']
    #allocation13 [shape = 'u8[4096]{0}', space=vmem, size = 0x1000, scoped, tag = 'output window, operand 2, single buffered']
    %13 = vsyncpa [#allocation3], 0
    %14 = vsyncpa [#allocation6], 0
    %15 = vsyncpa [#allocation9], 0
    %16 = vsyncpa [#allocation4], 0
    %17 = vsyncpa [#allocation12], 0
    // Predicated region
    $region2: #{tpu_custom_call.1} parent=1 // pred_check
      _
    $region3: #{tpu_custom_call.1} parent=1 // pred_check_branch
      %19 = sbr.rel (0) target = $region5
    $region4: #{tpu_custom_call.1} parent=1 // pred_region
      %s21 = ssub.s32 128, 128
      %22 = vsyncadd [#allocation3], %s21
      %s24 = sshll.u32 [#allocation2], 4
      %s25 = int_to_ptr.vmem [resolvable:$true] %s24
      %27 = dma.hbm_to_vmem [thread:$0]  %s0, 128, %s25, [#allocation3]
    $region5: #{tpu_custom_call.1} parent=1 // pred_fallthru
      _
    // Predicated region
    $region6: #{tpu_custom_call.1} parent=1 // pred_check
      _
    $region7: #{tpu_custom_call.1} parent=1 // pred_check_branch
      %29 = sbr.rel (0) target = $region9
    $region8: #{tpu_custom_call.1} parent=1 // pred_region
      %s31 = ssub.s32 2048, 2048
      %32 = vsyncadd [#allocation6], %s31
      %s33 = sshll.u32 [#allocation5], 4
      %s34 = int_to_ptr.vmem [resolvable:$true] %s33
      %39 = dma.hbm_to_vmem [thread:$0]  %s1, 2048, %s34, [#allocation6], 128, 128, 8
    $region9: #{tpu_custom_call.1} parent=1 // pred_fallthru
      _
    // Predicated region
    $region10: #{tpu_custom_call.1} parent=1 // pred_check
      _
    $region11: #{tpu_custom_call.1} parent=1 // pred_check_branch
      %41 = sbr.rel (0) target = $region13
    $region12: #{tpu_custom_call.1} parent=1 // pred_region
      %s43 = ssub.s32 2048, 2048
      %44 = vsyncadd [#allocation6], %s43
      %s45 = sshll.u32 [#allocation7], 4
      %s46 = int_to_ptr.vmem [resolvable:$true] %s45
      %51 = dma.hbm_to_vmem [thread:$0]  %s2, 2048, %s46, [#allocation6], 128, 128, 8
    $region13: #{tpu_custom_call.1} parent=1 // pred_fallthru
      _
    // Predicated region
    $region14: #{tpu_custom_call.1} parent=1 // pred_check
      _
    $region15: #{tpu_custom_call.1} parent=1 // pred_check_branch
      %53 = sbr.rel (0) target = $region17
    $region16: #{tpu_custom_call.1} parent=1 // pred_region
      %s55 = ssub.s32 2048, 2048
      %56 = vsyncadd [#allocation9], %s55
      %s57 = sshll.u32 [#allocation8], 4
      %s58 = int_to_ptr.vmem [resolvable:$true] %s57
      %63 = dma.hbm_to_vmem [thread:$0]  %s3, 2048, %s58, [#allocation9], 128, 128, 8
    $region17: #{tpu_custom_call.1} parent=1 // pred_fallthru
      _
    // Predicated region
    $region18: #{tpu_custom_call.1} parent=1 // pred_check
      _
    $region19: #{tpu_custom_call.1} parent=1 // pred_check_branch
      %65 = sbr.rel (0) target = $region21
    $region20: #{tpu_custom_call.1} parent=1 // pred_region
      _
    $region21: #{tpu_custom_call.1} parent=1 // pred_fallthru
      _
    // Predicated region
    $region22: #{tpu_custom_call.1} parent=1 // pred_check
      _
    $region23: #{tpu_custom_call.1} parent=1 // pred_check_branch
      %67 = sbr.rel (0) target = $region25
    $region24: #{tpu_custom_call.1} parent=1 // pred_region
      %68 = dma.done [#allocation3], 128
    $region25: #{tpu_custom_call.1} parent=1 // pred_fallthru
      _
    // Predicated region
    $region26: #{tpu_custom_call.1} parent=1 // pred_check
      _
    $region27: #{tpu_custom_call.1} parent=1 // pred_check_branch
      %70 = sbr.rel (0) target = $region29
    $region28: #{tpu_custom_call.1} parent=1 // pred_region
      %71 = dma.done [#allocation6], 2048
    $region29: #{tpu_custom_call.1} parent=1 // pred_fallthru
      _
    // Predicated region
    $region30: #{tpu_custom_call.1} parent=1 // pred_check
      _
    $region31: #{tpu_custom_call.1} parent=1 // pred_check_branch
      %73 = sbr.rel (0) target = $region33
    $region32: #{tpu_custom_call.1} parent=1 // pred_region
      %74 = dma.done [#allocation6], 2048
    $region33: #{tpu_custom_call.1} parent=1 // pred_fallthru
      _
    // Predicated region
    $region34: #{tpu_custom_call.1} parent=1 // pred_check
      _
    $region35: #{tpu_custom_call.1} parent=1 // pred_check_branch
      %76 = sbr.rel (0) target = $region37
    $region36: #{tpu_custom_call.1} parent=1 // pred_region
      %77 = dma.done [#allocation9], 2048
    $region37: #{tpu_custom_call.1} parent=1 // pred_fallthru
      _
    %v78 = vld [vmem:[#allocation2] sm:$0xff]
    %v79 = vld [vmem:[#allocation5] sm:$0xff]
    %v80 = vld [vmem:[#allocation5 + $0x8] sm:$0xff]
    %v81 = vld [vmem:[#allocation5 + $0x10] sm:$0xff]
    %v82 = vld [vmem:[#allocation5 + $0x18] sm:$0xff]
    %v83 = vld [vmem:[#allocation5 + $0x20] sm:$0xff]
    %v84 = vld [vmem:[#allocation5 + $0x28] sm:$0xff]
    %v85 = vld [vmem:[#allocation5 + $0x30] sm:$0xff]
    %v86 = vld [vmem:[#allocation5 + $0x38] sm:$0xff]
    %v87 = vld [vmem:[#allocation5 + $0x40] sm:$0xff]
    %v88 = vld [vmem:[#allocation5 + $0x48] sm:$0xff]
    %v89 = vld [vmem:[#allocation5 + $0x50] sm:$0xff]
    %v90 = vld [vmem:[#allocation5 + $0x58] sm:$0xff]
    %v91 = vld [vmem:[#allocation5 + $0x60] sm:$0xff]
    %v92 = vld [vmem:[#allocation5 + $0x68] sm:$0xff]
    %v93 = vld [vmem:[#allocation5 + $0x70] sm:$0xff]
    %v94 = vld [vmem:[#allocation5 + $0x78] sm:$0xff]
    %v95 = vld [vmem:[%s4] sm:$0x1]
    %v97 = vlaneseq
    %v98 = vshrl.u32 %v97, 7
    %v99 = vsub.s32 0, %v98
    %v100 = vrot.slane %v95, %v99
    %102 = vmatprep.subr.mxu0 0.0
    %103 = vmatpush1.msra.mxu0 %v79
    %104 = vmatprep.subr.mxu0 0.0
    %105 = vmatpush1.msra.mxu0 %v80
    %106 = vmatprep.subr.mxu0 0.0
    %107 = vmatpush1.msra.mxu0 %v81
    %108 = vmatprep.subr.mxu0 0.0
    %109 = vmatpush1.msra.mxu0 %v82
    %110 = vmatprep.subr.mxu0 0.0
    %111 = vmatpush1.msra.mxu0 %v83
    %112 = vmatprep.subr.mxu0 0.0
    %113 = vmatpush1.msra.mxu0 %v84
    %114 = vmatprep.subr.mxu0 0.0
    %115 = vmatpush1.msra.mxu0 %v85
    %116 = vmatprep.subr.mxu0 0.0
    %117 = vmatpush1.msra.mxu0 %v86
    %118 = vmatprep.subr.mxu0 0.0
    %119 = vmatpush1.msra.mxu0 %v87
    %120 = vmatprep.subr.mxu0 0.0
    %121 = vmatpush1.msra.mxu0 %v88
    %122 = vmatprep.subr.mxu0 0.0
    %123 = vmatpush1.msra.mxu0 %v89
    %124 = vmatprep.subr.mxu0 0.0
    %125 = vmatpush1.msra.mxu0 %v90
    %126 = vmatprep.subr.mxu0 0.0
    %127 = vmatpush1.msra.mxu0 %v91
    %128 = vmatprep.subr.mxu0 0.0
    %129 = vmatpush1.msra.mxu0 %v92
    %130 = vmatprep.subr.mxu0 0.0
    %131 = vmatpush1.msra.mxu0 %v93
    %132 = vmatprep.subr.mxu0 0.0
    %133 = vmatpush1.msra.mxu0 %v94
    %134 = vmatprep.subr.mxu0 0.0
    %135 = vmatpush1.msra.mxu0 0.0
    %136 = vmatprep.subr.mxu0 0.0
    %137 = vmatpush1.msra.mxu0 0.0
    %138 = vmatprep.subr.mxu0 0.0
    %139 = vmatpush1.msra.mxu0 0.0
    %140 = vmatprep.subr.mxu0 0.0
    %141 = vmatpush1.msra.mxu0 0.0
    %142 = vmatprep.subr.mxu0 0.0
    %143 = vmatpush1.msra.mxu0 0.0
    %144 = vmatprep.subr.mxu0 0.0
    %145 = vmatpush1.msra.mxu0 0.0
    %146 = vmatprep.subr.mxu0 0.0
    %147 = vmatpush1.msra.mxu0 0.0
    %148 = vmatprep.subr.mxu0 0.0
    %149 = vmatpush1.msra.mxu0 0.0
    %150 = vmatprep.subr.mxu0 0.0
    %151 = vmatpush1.msra.mxu0 0.0
    %152 = vmatprep.subr.mxu0 0.0
    %153 = vmatpush1.msra.mxu0 0.0
    %154 = vmatprep.subr.mxu0 0.0
    %155 = vmatpush1.msra.mxu0 0.0
    %156 = vmatprep.subr.mxu0 0.0
    %157 = vmatpush1.msra.mxu0 0.0
    %158 = vmatprep.subr.mxu0 0.0
    %159 = vmatpush1.msra.mxu0 0.0
    %160 = vmatprep.subr.mxu0 0.0
    %161 = vmatpush1.msra.mxu0 0.0
    %162 = vmatprep.subr.mxu0 0.0
    %163 = vmatpush1.msra.mxu0 0.0
    %164 = vmatprep.subr.mxu0 0.0
    %165 = vmatpush1.msra.mxu0 0.0
    %166 = vmatprep.mubr.f32.mxu0 0.0
    %167 = vmatmul.mubr.f32.gmra.mrb[0].mxu0 %v78
    %v168 = vpop.f32.mrb[0].mxu0
    %v169 = vadd.f32 %v100, %v168
    %v170 = vpop.f32.mrb[0].mxu0
    %171 = vdwg.mxu0
    %v172 = vtanh.pop %v169
    %173 = vst [vmem:[#allocation10] sm:$0xff] %v172
    %v174 = vld [vmem:[#allocation7] sm:$0xff]
    %v175 = vld [vmem:[#allocation7 + $0x8] sm:$0xff]
    %v176 = vld [vmem:[#allocation7 + $0x10] sm:$0xff]
    %v177 = vld [vmem:[#allocation7 + $0x18] sm:$0xff]
    %v178 = vld [vmem:[#allocation7 + $0x20] sm:$0xff]
    %v179 = vld [vmem:[#allocation7 + $0x28] sm:$0xff]
    %v180 = vld [vmem:[#allocation7 + $0x30] sm:$0xff]
    %v181 = vld [vmem:[#allocation7 + $0x38] sm:$0xff]
    %v182 = vld [vmem:[#allocation7 + $0x40] sm:$0xff]
    %v183 = vld [vmem:[#allocation7 + $0x48] sm:$0xff]
    %v184 = vld [vmem:[#allocation7 + $0x50] sm:$0xff]
    %v185 = vld [vmem:[#allocation7 + $0x58] sm:$0xff]
    %v186 = vld [vmem:[#allocation7 + $0x60] sm:$0xff]
    %v187 = vld [vmem:[#allocation7 + $0x68] sm:$0xff]
    %v188 = vld [vmem:[#allocation7 + $0x70] sm:$0xff]
    %v189 = vld [vmem:[#allocation7 + $0x78] sm:$0xff]
    %190 = vmatprep.subr.mxu0 0.0
    %191 = vmatpush1.msra.mxu0 %v174
    %192 = vmatprep.subr.mxu0 0.0
    %193 = vmatpush1.msra.mxu0 %v175
    %194 = vmatprep.subr.mxu0 0.0
    %195 = vmatpush1.msra.mxu0 %v176
    %196 = vmatprep.subr.mxu0 0.0
    %197 = vmatpush1.msra.mxu0 %v177
    %198 = vmatprep.subr.mxu0 0.0
    %199 = vmatpush1.msra.mxu0 %v178
    %200 = vmatprep.subr.mxu0 0.0
    %201 = vmatpush1.msra.mxu0 %v179
    %202 = vmatprep.subr.mxu0 0.0
    %203 = vmatpush1.msra.mxu0 %v180
    %204 = vmatprep.subr.mxu0 0.0
    %205 = vmatpush1.msra.mxu0 %v181
    %206 = vmatprep.subr.mxu0 0.0
    %207 = vmatpush1.msra.mxu0 %v182
    %208 = vmatprep.subr.mxu0 0.0
    %209 = vmatpush1.msra.mxu0 %v183
    %210 = vmatprep.subr.mxu0 0.0
    %211 = vmatpush1.msra.mxu0 %v184
    %212 = vmatprep.subr.mxu0 0.0
    %213 = vmatpush1.msra.mxu0 %v185
    %214 = vmatprep.subr.mxu0 0.0
    %215 = vmatpush1.msra.mxu0 %v186
    %216 = vmatprep.subr.mxu0 0.0
    %217 = vmatpush1.msra.mxu0 %v187
    %218 = vmatprep.subr.mxu0 0.0
    %219 = vmatpush1.msra.mxu0 %v188
    %220 = vmatprep.subr.mxu0 0.0
    %221 = vmatpush1.msra.mxu0 %v189
    %222 = vmatprep.subr.mxu0 0.0
    %223 = vmatpush1.msra.mxu0 0.0
    %224 = vmatprep.subr.mxu0 0.0
    %225 = vmatpush1.msra.mxu0 0.0
    %226 = vmatprep.subr.mxu0 0.0
    %227 = vmatpush1.msra.mxu0 0.0
    %228 = vmatprep.subr.mxu0 0.0
    %229 = vmatpush1.msra.mxu0 0.0
    %230 = vmatprep.subr.mxu0 0.0
    %231 = vmatpush1.msra.mxu0 0.0
    %232 = vmatprep.subr.mxu0 0.0
    %233 = vmatpush1.msra.mxu0 0.0
    %234 = vmatprep.subr.mxu0 0.0
    %235 = vmatpush1.msra.mxu0 0.0
    %236 = vmatprep.subr.mxu0 0.0
    %237 = vmatpush1.msra.mxu0 0.0
    %238 = vmatprep.subr.mxu0 0.0
    %239 = vmatpush1.msra.mxu0 0.0
    %240 = vmatprep.subr.mxu0 0.0
    %241 = vmatpush1.msra.mxu0 0.0
    %242 = vmatprep.subr.mxu0 0.0
    %243 = vmatpush1.msra.mxu0 0.0
    %244 = vmatprep.subr.mxu0 0.0
    %245 = vmatpush1.msra.mxu0 0.0
    %246 = vmatprep.subr.mxu0 0.0
    %247 = vmatpush1.msra.mxu0 0.0
    %248 = vmatprep.subr.mxu0 0.0
    %249 = vmatpush1.msra.mxu0 0.0
    %250 = vmatprep.subr.mxu0 0.0
    %251 = vmatpush1.msra.mxu0 0.0
    %252 = vmatprep.subr.mxu0 0.0
    %253 = vmatpush1.msra.mxu0 0.0
    %254 = vmatprep.mubr.f32.mxu0 0.0
    %255 = vmatmul.mubr.f32.gmra.mrb[0].mxu0 %v78
    %v256 = vpop.f32.mrb[0].mxu0
    %v257 = vadd.f32 0.0, %v256
    %v258 = vpop.f32.mrb[0].mxu0
    %259 = vdwg.mxu0
    %260 = vst [vmem:[#allocation11] sm:$0xff] %v257
    %v261 = vld [vmem:[#allocation8] sm:$0xff]
    %v262 = vld [vmem:[#allocation8 + $0x8] sm:$0xff]
    %v263 = vld [vmem:[#allocation8 + $0x10] sm:$0xff]
    %v264 = vld [vmem:[#allocation8 + $0x18] sm:$0xff]
    %v265 = vld [vmem:[#allocation8 + $0x20] sm:$0xff]
    %v266 = vld [vmem:[#allocation8 + $0x28] sm:$0xff]
    %v267 = vld [vmem:[#allocation8 + $0x30] sm:$0xff]
    %v268 = vld [vmem:[#allocation8 + $0x38] sm:$0xff]
    %v269 = vld [vmem:[#allocation8 + $0x40] sm:$0xff]
    %v270 = vld [vmem:[#allocation8 + $0x48] sm:$0xff]
    %v271 = vld [vmem:[#allocation8 + $0x50] sm:$0xff]
    %v272 = vld [vmem:[#allocation8 + $0x58] sm:$0xff]
    %v273 = vld [vmem:[#allocation8 + $0x60] sm:$0xff]
    %v274 = vld [vmem:[#allocation8 + $0x68] sm:$0xff]
    %v275 = vld [vmem:[#allocation8 + $0x70] sm:$0xff]
    %v276 = vld [vmem:[#allocation8 + $0x78] sm:$0xff]
    %277 = vmatprep.subr.mxu0 0.0
    %278 = vmatpush1.msra.mxu0 %v261
    %279 = vmatprep.subr.mxu0 0.0
    %280 = vmatpush1.msra.mxu0 %v262
    %281 = vmatprep.subr.mxu0 0.0
    %282 = vmatpush1.msra.mxu0 %v263
    %283 = vmatprep.subr.mxu0 0.0
    %284 = vmatpush1.msra.mxu0 %v264
    %285 = vmatprep.subr.mxu0 0.0
    %286 = vmatpush1.msra.mxu0 %v265
    %287 = vmatprep.subr.mxu0 0.0
    %288 = vmatpush1.msra.mxu0 %v266
    %289 = vmatprep.subr.mxu0 0.0
    %290 = vmatpush1.msra.mxu0 %v267
    %291 = vmatprep.subr.mxu0 0.0
    %292 = vmatpush1.msra.mxu0 %v268
    %293 = vmatprep.subr.mxu0 0.0
    %294 = vmatpush1.msra.mxu0 %v269
    %295 = vmatprep.subr.mxu0 0.0
    %296 = vmatpush1.msra.mxu0 %v270
    %297 = vmatprep.subr.mxu0 0.0
    %298 = vmatpush1.msra.mxu0 %v271
    %299 = vmatprep.subr.mxu0 0.0
    %300 = vmatpush1.msra.mxu0 %v272
    %301 = vmatprep.subr.mxu0 0.0
    %302 = vmatpush1.msra.mxu0 %v273
    %303 = vmatprep.subr.mxu0 0.0
    %304 = vmatpush1.msra.mxu0 %v274
    %305 = vmatprep.subr.mxu0 0.0
    %306 = vmatpush1.msra.mxu0 %v275
    %307 = vmatprep.subr.mxu0 0.0
    %308 = vmatpush1.msra.mxu0 %v276
    %309 = vmatprep.subr.mxu0 0.0
    %310 = vmatpush1.msra.mxu0 0.0
    %311 = vmatprep.subr.mxu0 0.0
    %312 = vmatpush1.msra.mxu0 0.0
    %313 = vmatprep.subr.mxu0 0.0
    %314 = vmatpush1.msra.mxu0 0.0
    %315 = vmatprep.subr.mxu0 0.0
    %316 = vmatpush1.msra.mxu0 0.0
    %317 = vmatprep.subr.mxu0 0.0
    %318 = vmatpush1.msra.mxu0 0.0
    %319 = vmatprep.subr.mxu0 0.0
    %320 = vmatpush1.msra.mxu0 0.0
    %321 = vmatprep.subr.mxu0 0.0
    %322 = vmatpush1.msra.mxu0 0.0
    %323 = vmatprep.subr.mxu0 0.0
    %324 = vmatpush1.msra.mxu0 0.0
    %325 = vmatprep.subr.mxu0 0.0
    %326 = vmatpush1.msra.mxu0 0.0
    %327 = vmatprep.subr.mxu0 0.0
    %328 = vmatpush1.msra.mxu0 0.0
    %329 = vmatprep.subr.mxu0 0.0
    %330 = vmatpush1.msra.mxu0 0.0
    %331 = vmatprep.subr.mxu0 0.0
    %332 = vmatpush1.msra.mxu0 0.0
    %333 = vmatprep.subr.mxu0 0.0
    %334 = vmatpush1.msra.mxu0 0.0
    %335 = vmatprep.subr.mxu0 0.0
    %336 = vmatpush1.msra.mxu0 0.0
    %337 = vmatprep.subr.mxu0 0.0
    %338 = vmatpush1.msra.mxu0 0.0
    %339 = vmatprep.subr.mxu0 0.0
    %340 = vmatpush1.msra.mxu0 0.0
    %341 = vmatprep.mubr.f32.mxu0 0.0
    %342 = vmatmul.mubr.f32.gmra.mrb[0].mxu0 %v78
    %v343 = vpop.f32.mrb[0].mxu0
    %v344 = vadd.f32 0.0, %v343
    %v345 = vpop.f32.mrb[0].mxu0
    %346 = vdwg.mxu0
    %347 = vst [vmem:[#allocation13] sm:$0xff] %v344
    // Predicated region
    $region38: #{tpu_custom_call.1} parent=1 // pred_check
      _
    $region39: #{tpu_custom_call.1} parent=1 // pred_check_branch
      %349 = sbr.rel (0) target = $region41
    $region40: #{tpu_custom_call.1} parent=1 // pred_region
      %s351 = ssub.s32 128, 128
      %352 = vsyncadd [#allocation4], %s351
      %s354 = sshll.u32 [#allocation10], 4
      %s355 = int_to_ptr.vmem [resolvable:$true] %s354
      %357 = dma.vmem_to_hbm [thread:$0]  %s355, 128, %s5, [#allocation4]
    $region41: #{tpu_custom_call.1} parent=1 // pred_fallthru
      _
    // Predicated region
    $region42: #{tpu_custom_call.1} parent=1 // pred_check
      _
    $region43: #{tpu_custom_call.1} parent=1 // pred_check_branch
      %359 = sbr.rel (0) target = $region45
    $region44: #{tpu_custom_call.1} parent=1 // pred_region
      %s361 = ssub.s32 128, 128
      %362 = vsyncadd [#allocation12], %s361
      %s364 = sshll.u32 [#allocation11], 4
      %s365 = int_to_ptr.vmem [resolvable:$true] %s364
      %367 = dma.vmem_to_hbm [thread:$0]  %s365, 128, %s6, [#allocation12]
    $region45: #{tpu_custom_call.1} parent=1 // pred_fallthru
      _
    // Predicated region
    $region46: #{tpu_custom_call.1} parent=1 // pred_check
      _
    $region47: #{tpu_custom_call.1} parent=1 // pred_check_branch
      %369 = sbr.rel (0) target = $region49
    $region48: #{tpu_custom_call.1} parent=1 // pred_region
      %s371 = ssub.s32 128, 128
      %372 = vsyncadd [#allocation12], %s371
      %s374 = sshll.u32 [#allocation13], 4
      %s375 = int_to_ptr.vmem [resolvable:$true] %s374
      %377 = dma.vmem_to_hbm [thread:$0]  %s375, 128, %s7, [#allocation12]
    $region49: #{tpu_custom_call.1} parent=1 // pred_fallthru
      _
    // Predicated region
    $region50: #{tpu_custom_call.1} parent=1 // pred_check
      _
    $region51: #{tpu_custom_call.1} parent=1 // pred_check_branch
      %379 = sbr.rel (0) target = $region53
    $region52: #{tpu_custom_call.1} parent=1 // pred_region
      %380 = dma.done [#allocation4], 128
    $region53: #{tpu_custom_call.1} parent=1 // pred_fallthru
      _
    // Predicated region
    $region54: #{tpu_custom_call.1} parent=1 // pred_check
      _
    $region55: #{tpu_custom_call.1} parent=1 // pred_check_branch
      %382 = sbr.rel (0) target = $region57
    $region56: #{tpu_custom_call.1} parent=1 // pred_region
      %383 = dma.done [#allocation12], 128
    $region57: #{tpu_custom_call.1} parent=1 // pred_fallthru
      _
    // Predicated region
    $region58: #{tpu_custom_call.1} parent=1 // pred_check
      _
    $region59: #{tpu_custom_call.1} parent=1 // pred_check_branch
      %385 = sbr.rel (0) target = $region61
    $region60: #{tpu_custom_call.1} parent=1 // pred_region
      %386 = dma.done [#allocation12], 128
    $region61: #{tpu_custom_call.1} parent=1 // pred_fallthru
      _
    %387 = vsyncpa [#allocation3], 1
    %388 = vsyncpa [#allocation6], 1
    %389 = vsyncpa [#allocation9], 1
    %390 = vsyncpa [#allocation4], 1
    %391 = vsyncpa [#allocation12], 1

// kernel: tpu_custom_call.1
$region0: #{tpu_custom_call.1}
  #allocation0 [shape = 'u32[]', space=smem, size = 0x4, offset = 0x4, fixed_abs, tag = 'smem constant byte address 0x4 - core index']
  #allocation1 [shape = 'u32[144,128]{1,0:T(1,128)}', space=vmem, size = 0x12000, scoped, tag = 'internal scratch']
  %s0 = inlined_call_operand.hbm [shape: f32[8,128], index: 0, kind: input, shape index: {}]
  %s1 = inlined_call_operand.hbm [shape: f32[128,128], index: 1, kind: input, shape index: {}]
  %s2 = inlined_call_operand.hbm [shape: f32[128,128], index: 2, kind: input, shape index: {}]
  %s3 = inlined_call_operand.hbm [shape: f32[128,128], index: 3, kind: input, shape index: {}]
  %s4 = inlined_call_operand.vmem [shape: f32[1,128], index: 4, kind: input, shape index: {}]
  %s5 = inlined_call_operand.hbm [shape: f32[8,128], index: 5, kind: output, shape index: {0}]
  %s6 = inlined_call_operand.hbm [shape: f32[8,128], index: 6, kind: output, shape index: {1}]
  %s7 = inlined_call_operand.hbm [shape: f32[8,128], index: 7, kind: output, shape index: {2}]
  %8 = xla_tuple %s5, %s6, %s7
  %s9 = sld [smem:[#allocation0]]
  $region62: #{tpu_custom_call.1} parent=0
    _
  %s11 = ssub.s32 1, %s9
  %s12 = scalar_select 0, %s11, %s9
  $region1: #{tpu_custom_call.1} parent=0
    #allocation2 [shape = 'u8[4096]{0}', space=vmem, size = 0x1000, scoped, tag = 'input window, operand 0, single buffered']
    #allocation3 [shape = 's32[1]{0}', space=sflag, size = 0x4, scoped, tag = 'scoped memory for tpu_custom_call.1']
    #allocation4 [shape = 's32[1]{0}', space=sflag, size = 0x4, scoped, tag = 'scoped memory for tpu_custom_call.1']
    #allocation5 [shape = 'u8[65536]{0}', space=vmem, size = 0x10000, scoped, tag = 'input window, operand 1, single buffered']
    #allocation6 [shape = 's32[1]{0}', space=sflag, size = 0x4, scoped, tag = 'scoped memory for tpu_custom_call.1']
    #allocation7 [shape = 'u8[65536]{0}', space=vmem, size = 0x10000, scoped, tag = 'input window, operand 2, single buffered']
    #allocation8 [shape = 'u8[65536]{0}', space=vmem, size = 0x10000, scoped, tag = 'input window, operand 3, single buffered']
    #allocation9 [shape = 's32[1]{0}', space=sflag, size = 0x4, scoped, tag = 'scoped memory for tpu_custom_call.1']
    #allocation10 [shape = 'u8[4096]{0}', space=vmem, size = 0x1000, scoped, tag = 'output window, operand 0, single buffered']
    #allocation11 [shape = 'u8[4096]{0}', space=vmem, size = 0x1000, scoped, tag = 'output window, operand 1, single buffered']
    #allocation12 [shape = 's32[1]{0}', space=sflag, size = 0x4, scoped, tag = 'scoped memory for tpu_custom_call.1']
    #allocation13 [shape = 'u8[4096]{0}', space=vmem, size = 0x1000, scoped, tag = 'output window, operand 2, single buffered']
    %13 = vsyncpa [#allocation3], 0
    %14 = vsyncpa [#allocation6], 0
    %15 = vsyncpa [#allocation9], 0
    %16 = vsyncpa [#allocation4], 0
    %17 = vsyncpa [#allocation12], 0
    // Predicated region
    $region2: #{tpu_custom_call.1} parent=1 // pred_check
      _
    $region3: #{tpu_custom_call.1} parent=1 // pred_check_branch
      %19 = sbr.rel (0) target = $region5
    $region4: #{tpu_custom_call.1} parent=1 // pred_region
      %s21 = ssub.s32 128, 128
      %22 = vsyncadd [#allocation3], %s21
      %s24 = sshll.u32 [#allocation2], 4
      %s25 = int_to_ptr.vmem [resolvable:$true] %s24
      %27 = dma.hbm_to_vmem [thread:$0]  %s0, 128, %s25, [#allocation3]
    $region5: #{tpu_custom_call.1} parent=1 // pred_fallthru
      _
    // Predicated region
    $region6: #{tpu_custom_call.1} parent=1 // pred_check
      _
    $region7: #{tpu_custom_call.1} parent=1 // pred_check_branch
      %29 = sbr.rel (0) target = $region9
    $region8: #{tpu_custom_call.1} parent=1 // pred_region
      %s31 = ssub.s32 2048, 2048
      %32 = vsyncadd [#allocation6], %s31
      %s33 = sshll.u32 [#allocation5], 4
      %s34 = int_to_ptr.vmem [resolvable:$true] %s33
      %39 = dma.hbm_to_vmem [thread:$0]  %s1, 2048, %s34, [#allocation6], 128, 128, 8
    $region9: #{tpu_custom_call.1} parent=1 // pred_fallthru
      _
    // Predicated region
    $region10: #{tpu_custom_call.1} parent=1 // pred_check
      _
    $region11: #{tpu_custom_call.1} parent=1 // pred_check_branch
      %41 = sbr.rel (0) target = $region13
    $region12: #{tpu_custom_call.1} parent=1 // pred_region
      %s43 = ssub.s32 2048, 2048
      %44 = vsyncadd [#allocation6], %s43
      %s45 = sshll.u32 [#allocation7], 4
      %s46 = int_to_ptr.vmem [resolvable:$true] %s45
      %51 = dma.hbm_to_vmem [thread:$0]  %s2, 2048, %s46, [#allocation6], 128, 128, 8
    $region13: #{tpu_custom_call.1} parent=1 // pred_fallthru
      _
    // Predicated region
    $region14: #{tpu_custom_call.1} parent=1 // pred_check
      _
    $region15: #{tpu_custom_call.1} parent=1 // pred_check_branch
      %53 = sbr.rel (0) target = $region17
    $region16: #{tpu_custom_call.1} parent=1 // pred_region
      %s55 = ssub.s32 2048, 2048
      %56 = vsyncadd [#allocation9], %s55
      %s57 = sshll.u32 [#allocation8], 4
      %s58 = int_to_ptr.vmem [resolvable:$true] %s57
      %63 = dma.hbm_to_vmem [thread:$0]  %s3, 2048, %s58, [#allocation9], 128, 128, 8
    $region17: #{tpu_custom_call.1} parent=1 // pred_fallthru
      _
    // Predicated region
    $region18: #{tpu_custom_call.1} parent=1 // pred_check
      _
    $region19: #{tpu_custom_call.1} parent=1 // pred_check_branch
      %65 = sbr.rel (0) target = $region21
    $region20: #{tpu_custom_call.1} parent=1 // pred_region
      _
    $region21: #{tpu_custom_call.1} parent=1 // pred_fallthru
      _
    // Predicated region
    $region22: #{tpu_custom_call.1} parent=1 // pred_check
      _
    $region23: #{tpu_custom_call.1} parent=1 // pred_check_branch
      %67 = sbr.rel (0) target = $region25
    $region24: #{tpu_custom_call.1} parent=1 // pred_region
      %68 = dma.done [#allocation3], 128
    $region25: #{tpu_custom_call.1} parent=1 // pred_fallthru
      _
    // Predicated region
    $region26: #{tpu_custom_call.1} parent=1 // pred_check
      _
    $region27: #{tpu_custom_call.1} parent=1 // pred_check_branch
      %70 = sbr.rel (0) target = $region29
    $region28: #{tpu_custom_call.1} parent=1 // pred_region
      %71 = dma.done [#allocation6], 2048
    $region29: #{tpu_custom_call.1} parent=1 // pred_fallthru
      _
    // Predicated region
    $region30: #{tpu_custom_call.1} parent=1 // pred_check
      _
    $region31: #{tpu_custom_call.1} parent=1 // pred_check_branch
      %73 = sbr.rel (0) target = $region33
    $region32: #{tpu_custom_call.1} parent=1 // pred_region
      %74 = dma.done [#allocation6], 2048
    $region33: #{tpu_custom_call.1} parent=1 // pred_fallthru
      _
    // Predicated region
    $region34: #{tpu_custom_call.1} parent=1 // pred_check
      _
    $region35: #{tpu_custom_call.1} parent=1 // pred_check_branch
      %76 = sbr.rel (0) target = $region37
    $region36: #{tpu_custom_call.1} parent=1 // pred_region
      %77 = dma.done [#allocation9], 2048
    $region37: #{tpu_custom_call.1} parent=1 // pred_fallthru
      _
    %v78 = vld [vmem:[#allocation2] sm:$0xff]
    %v79 = vld [vmem:[#allocation5] sm:$0xff]
    %v80 = vld [vmem:[#allocation5 + $0x8] sm:$0xff]
    %v81 = vld [vmem:[#allocation5 + $0x10] sm:$0xff]
    %v82 = vld [vmem:[#allocation5 + $0x18] sm:$0xff]
    %v83 = vld [vmem:[#allocation5 + $0x20] sm:$0xff]
    %v84 = vld [vmem:[#allocation5 + $0x28] sm:$0xff]
    %v85 = vld [vmem:[#allocation5 + $0x30] sm:$0xff]
    %v86 = vld [vmem:[#allocation5 + $0x38] sm:$0xff]
    %v87 = vld [vmem:[#allocation5 + $0x40] sm:$0xff]
    %v88 = vld [vmem:[#allocation5 + $0x48] sm:$0xff]
    %v89 = vld [vmem:[#allocation5 + $0x50] sm:$0xff]
    %v90 = vld [vmem:[#allocation5 + $0x58] sm:$0xff]
    %v91 = vld [vmem:[#allocation5 + $0x60] sm:$0xff]
    %v92 = vld [vmem:[#allocation5 + $0x68] sm:$0xff]
    %v93 = vld [vmem:[#allocation5 + $0x70] sm:$0xff]
    %v94 = vld [vmem:[#allocation5 + $0x78] sm:$0xff]
    %v95 = vld [vmem:[%s4] sm:$0x1]
    %v97 = vlaneseq
    %v98 = vshrl.u32 %v97, 7
    %v99 = vsub.s32 0, %v98
    %v100 = vrot.slane %v95, %v99
    %102 = vmatprep.subr.mxu0 0.0
    %103 = vmatpush1.msra.mxu0 %v79
    %104 = vmatprep.subr.mxu0 0.0
    %105 = vmatpush1.msra.mxu0 %v80
    %106 = vmatprep.subr.mxu0 0.0
    %107 = vmatpush1.msra.mxu0 %v81
    %108 = vmatprep.subr.mxu0 0.0
    %109 = vmatpush1.msra.mxu0 %v82
    %110 = vmatprep.subr.mxu0 0.0
    %111 = vmatpush1.msra.mxu0 %v83
    %112 = vmatprep.subr.mxu0 0.0
    %113 = vmatpush1.msra.mxu0 %v84
    %114 = vmatprep.subr.mxu0 0.0
    %115 = vmatpush1.msra.mxu0 %v85
    %116 = vmatprep.subr.mxu0 0.0
    %117 = vmatpush1.msra.mxu0 %v86
    %118 = vmatprep.subr.mxu0 0.0
    %119 = vmatpush1.msra.mxu0 %v87
    %120 = vmatprep.subr.mxu0 0.0
    %121 = vmatpush1.msra.mxu0 %v88
    %122 = vmatprep.subr.mxu0 0.0
    %123 = vmatpush1.msra.mxu0 %v89
    %124 = vmatprep.subr.mxu0 0.0
    %125 = vmatpush1.msra.mxu0 %v90
    %126 = vmatprep.subr.mxu0 0.0
    %127 = vmatpush1.msra.mxu0 %v91
    %128 = vmatprep.subr.mxu0 0.0
    %129 = vmatpush1.msra.mxu0 %v92
    %130 = vmatprep.subr.mxu0 0.0
    %131 = vmatpush1.msra.mxu0 %v93
    %132 = vmatprep.subr.mxu0 0.0
    %133 = vmatpush1.msra.mxu0 %v94
    %134 = vmatprep.subr.mxu0 0.0
    %135 = vmatpush1.msra.mxu0 0.0
    %136 = vmatprep.subr.mxu0 0.0
    %137 = vmatpush1.msra.mxu0 0.0
    %138 = vmatprep.subr.mxu0 0.0
    %139 = vmatpush1.msra.mxu0 0.0
    %140 = vmatprep.subr.mxu0 0.0
    %141 = vmatpush1.msra.mxu0 0.0
    %142 = vmatprep.subr.mxu0 0.0
    %143 = vmatpush1.msra.mxu0 0.0
    %144 = vmatprep.subr.mxu0 0.0
    %145 = vmatpush1.msra.mxu0 0.0
    %146 = vmatprep.subr.mxu0 0.0
    %147 = vmatpush1.msra.mxu0 0.0
    %148 = vmatprep.subr.mxu0 0.0
    %149 = vmatpush1.msra.mxu0 0.0
    %150 = vmatprep.subr.mxu0 0.0
    %151 = vmatpush1.msra.mxu0 0.0
    %152 = vmatprep.subr.mxu0 0.0
    %153 = vmatpush1.msra.mxu0 0.0
    %154 = vmatprep.subr.mxu0 0.0
    %155 = vmatpush1.msra.mxu0 0.0
    %156 = vmatprep.subr.mxu0 0.0
    %157 = vmatpush1.msra.mxu0 0.0
    %158 = vmatprep.subr.mxu0 0.0
    %159 = vmatpush1.msra.mxu0 0.0
    %160 = vmatprep.subr.mxu0 0.0
    %161 = vmatpush1.msra.mxu0 0.0
    %162 = vmatprep.subr.mxu0 0.0
    %163 = vmatpush1.msra.mxu0 0.0
    %164 = vmatprep.subr.mxu0 0.0
    %165 = vmatpush1.msra.mxu0 0.0
    %166 = vmatprep.mubr.f32.mxu0 0.0
    %167 = vmatmul.mubr.f32.gmra.mrb[0].mxu0 %v78
    %v168 = vpop.f32.mrb[0].mxu0
    %v169 = vadd.f32 %v100, %v168
    %v170 = vpop.f32.mrb[0].mxu0
    %171 = vdwg.mxu0
    %v172 = vtanh.pop %v169
    %173 = vst [vmem:[#allocation10] sm:$0xff] %v172
    %v174 = vld [vmem:[#allocation7] sm:$0xff]
    %v175 = vld [vmem:[#allocation7 + $0x8] sm:$0xff]
    %v176 = vld [vmem:[#allocation7 + $0x10] sm:$0xff]
    %v177 = vld [vmem:[#allocation7 + $0x18] sm:$0xff]
    %v178 = vld [vmem:[#allocation7 + $0x20] sm:$0xff]
    %v179 = vld [vmem:[#allocation7 + $0x28] sm:$0xff]
    %v180 = vld [vmem:[#allocation7 + $0x30] sm:$0xff]
    %v181 = vld [vmem:[#allocation7 + $0x38] sm:$0xff]
    %v182 = vld [vmem:[#allocation7 + $0x40] sm:$0xff]
    %v183 = vld [vmem:[#allocation7 + $0x48] sm:$0xff]
    %v184 = vld [vmem:[#allocation7 + $0x50] sm:$0xff]
    %v185 = vld [vmem:[#allocation7 + $0x58] sm:$0xff]
    %v186 = vld [vmem:[#allocation7 + $0x60] sm:$0xff]
    %v187 = vld [vmem:[#allocation7 + $0x68] sm:$0xff]
    %v188 = vld [vmem:[#allocation7 + $0x70] sm:$0xff]
    %v189 = vld [vmem:[#allocation7 + $0x78] sm:$0xff]
    %190 = vmatprep.subr.mxu0 0.0
    %191 = vmatpush1.msra.mxu0 %v174
    %192 = vmatprep.subr.mxu0 0.0
    %193 = vmatpush1.msra.mxu0 %v175
    %194 = vmatprep.subr.mxu0 0.0
    %195 = vmatpush1.msra.mxu0 %v176
    %196 = vmatprep.subr.mxu0 0.0
    %197 = vmatpush1.msra.mxu0 %v177
    %198 = vmatprep.subr.mxu0 0.0
    %199 = vmatpush1.msra.mxu0 %v178
    %200 = vmatprep.subr.mxu0 0.0
    %201 = vmatpush1.msra.mxu0 %v179
    %202 = vmatprep.subr.mxu0 0.0
    %203 = vmatpush1.msra.mxu0 %v180
    %204 = vmatprep.subr.mxu0 0.0
    %205 = vmatpush1.msra.mxu0 %v181
    %206 = vmatprep.subr.mxu0 0.0
    %207 = vmatpush1.msra.mxu0 %v182
    %208 = vmatprep.subr.mxu0 0.0
    %209 = vmatpush1.msra.mxu0 %v183
    %210 = vmatprep.subr.mxu0 0.0
    %211 = vmatpush1.msra.mxu0 %v184
    %212 = vmatprep.subr.mxu0 0.0
    %213 = vmatpush1.msra.mxu0 %v185
    %214 = vmatprep.subr.mxu0 0.0
    %215 = vmatpush1.msra.mxu0 %v186
    %216 = vmatprep.subr.mxu0 0.0
    %217 = vmatpush1.msra.mxu0 %v187
    %218 = vmatprep.subr.mxu0 0.0
    %219 = vmatpush1.msra.mxu0 %v188
    %220 = vmatprep.subr.mxu0 0.0
    %221 = vmatpush1.msra.mxu0 %v189
    %222 = vmatprep.subr.mxu0 0.0
    %223 = vmatpush1.msra.mxu0 0.0
    %224 = vmatprep.subr.mxu0 0.0
    %225 = vmatpush1.msra.mxu0 0.0
    %226 = vmatprep.subr.mxu0 0.0
    %227 = vmatpush1.msra.mxu0 0.0
    %228 = vmatprep.subr.mxu0 0.0
    %229 = vmatpush1.msra.mxu0 0.0
    %230 = vmatprep.subr.mxu0 0.0
    %231 = vmatpush1.msra.mxu0 0.0
    %232 = vmatprep.subr.mxu0 0.0
    %233 = vmatpush1.msra.mxu0 0.0
    %234 = vmatprep.subr.mxu0 0.0
    %235 = vmatpush1.msra.mxu0 0.0
    %236 = vmatprep.subr.mxu0 0.0
    %237 = vmatpush1.msra.mxu0 0.0
    %238 = vmatprep.subr.mxu0 0.0
    %239 = vmatpush1.msra.mxu0 0.0
    %240 = vmatprep.subr.mxu0 0.0
    %241 = vmatpush1.msra.mxu0 0.0
    %242 = vmatprep.subr.mxu0 0.0
    %243 = vmatpush1.msra.mxu0 0.0
    %244 = vmatprep.subr.mxu0 0.0
    %245 = vmatpush1.msra.mxu0 0.0
    %246 = vmatprep.subr.mxu0 0.0
    %247 = vmatpush1.msra.mxu0 0.0
    %248 = vmatprep.subr.mxu0 0.0
    %249 = vmatpush1.msra.mxu0 0.0
    %250 = vmatprep.subr.mxu0 0.0
    %251 = vmatpush1.msra.mxu0 0.0
    %252 = vmatprep.subr.mxu0 0.0
    %253 = vmatpush1.msra.mxu0 0.0
    %254 = vmatprep.mubr.f32.mxu0 0.0
    %255 = vmatmul.mubr.f32.gmra.mrb[0].mxu0 %v78
    %v256 = vpop.f32.mrb[0].mxu0
    %v257 = vadd.f32 0.0, %v256
    %v258 = vpop.f32.mrb[0].mxu0
    %259 = vdwg.mxu0
    %260 = vst [vmem:[#allocation11] sm:$0xff] %v257
    %v261 = vld [vmem:[#allocation8] sm:$0xff]
    %v262 = vld [vmem:[#allocation8 + $0x8] sm:$0xff]
    %v263 = vld [vmem:[#allocation8 + $0x10] sm:$0xff]
    %v264 = vld [vmem:[#allocation8 + $0x18] sm:$0xff]
    %v265 = vld [vmem:[#allocation8 + $0x20] sm:$0xff]
    %v266 = vld [vmem:[#allocation8 + $0x28] sm:$0xff]
    %v267 = vld [vmem:[#allocation8 + $0x30] sm:$0xff]
    %v268 = vld [vmem:[#allocation8 + $0x38] sm:$0xff]
    %v269 = vld [vmem:[#allocation8 + $0x40] sm:$0xff]
    %v270 = vld [vmem:[#allocation8 + $0x48] sm:$0xff]
    %v271 = vld [vmem:[#allocation8 + $0x50] sm:$0xff]
    %v272 = vld [vmem:[#allocation8 + $0x58] sm:$0xff]
    %v273 = vld [vmem:[#allocation8 + $0x60] sm:$0xff]
    %v274 = vld [vmem:[#allocation8 + $0x68] sm:$0xff]
    %v275 = vld [vmem:[#allocation8 + $0x70] sm:$0xff]
    %v276 = vld [vmem:[#allocation8 + $0x78] sm:$0xff]
    %277 = vmatprep.subr.mxu0 0.0
    %278 = vmatpush1.msra.mxu0 %v261
    %279 = vmatprep.subr.mxu0 0.0
    %280 = vmatpush1.msra.mxu0 %v262
    %281 = vmatprep.subr.mxu0 0.0
    %282 = vmatpush1.msra.mxu0 %v263
    %283 = vmatprep.subr.mxu0 0.0
    %284 = vmatpush1.msra.mxu0 %v264
    %285 = vmatprep.subr.mxu0 0.0
    %286 = vmatpush1.msra.mxu0 %v265
    %287 = vmatprep.subr.mxu0 0.0
    %288 = vmatpush1.msra.mxu0 %v266
    %289 = vmatprep.subr.mxu0 0.0
    %290 = vmatpush1.msra.mxu0 %v267
    %291 = vmatprep.subr.mxu0 0.0
    %292 = vmatpush1.msra.mxu0 %v268
    %293 = vmatprep.subr.mxu0 0.0
    %294 = vmatpush1.msra.mxu0 %v269
    %295 = vmatprep.subr.mxu0 0.0
    %296 = vmatpush1.msra.mxu0 %v270
    %297 = vmatprep.subr.mxu0 0.0
    %298 = vmatpush1.msra.mxu0 %v271
    %299 = vmatprep.subr.mxu0 0.0
    %300 = vmatpush1.msra.mxu0 %v272
    %301 = vmatprep.subr.mxu0 0.0
    %302 = vmatpush1.msra.mxu0 %v273
    %303 = vmatprep.subr.mxu0 0.0
    %304 = vmatpush1.msra.mxu0 %v274
    %305 = vmatprep.subr.mxu0 0.0
    %306 = vmatpush1.msra.mxu0 %v275
    %307 = vmatprep.subr.mxu0 0.0
    %308 = vmatpush1.msra.mxu0 %v276
    %309 = vmatprep.subr.mxu0 0.0
    %310 = vmatpush1.msra.mxu0 0.0
    %311 = vmatprep.subr.mxu0 0.0
    %312 = vmatpush1.msra.mxu0 0.0
    %313 = vmatprep.subr.mxu0 0.0
    %314 = vmatpush1.msra.mxu0 0.0
    %315 = vmatprep.subr.mxu0 0.0
    %316 = vmatpush1.msra.mxu0 0.0
    %317 = vmatprep.subr.mxu0 0.0
    %318 = vmatpush1.msra.mxu0 0.0
    %319 = vmatprep.subr.mxu0 0.0
    %320 = vmatpush1.msra.mxu0 0.0
    %321 = vmatprep.subr.mxu0 0.0
    %322 = vmatpush1.msra.mxu0 0.0
    %323 = vmatprep.subr.mxu0 0.0
    %324 = vmatpush1.msra.mxu0 0.0
    %325 = vmatprep.subr.mxu0 0.0
    %326 = vmatpush1.msra.mxu0 0.0
    %327 = vmatprep.subr.mxu0 0.0
    %328 = vmatpush1.msra.mxu0 0.0
    %329 = vmatprep.subr.mxu0 0.0
    %330 = vmatpush1.msra.mxu0 0.0
    %331 = vmatprep.subr.mxu0 0.0
    %332 = vmatpush1.msra.mxu0 0.0
    %333 = vmatprep.subr.mxu0 0.0
    %334 = vmatpush1.msra.mxu0 0.0
    %335 = vmatprep.subr.mxu0 0.0
    %336 = vmatpush1.msra.mxu0 0.0
    %337 = vmatprep.subr.mxu0 0.0
    %338 = vmatpush1.msra.mxu0 0.0
    %339 = vmatprep.subr.mxu0 0.0
    %340 = vmatpush1.msra.mxu0 0.0
    %341 = vmatprep.mubr.f32.mxu0 0.0
    %342 = vmatmul.mubr.f32.gmra.mrb[0].mxu0 %v78
    %v343 = vpop.f32.mrb[0].mxu0
    %v344 = vadd.f32 0.0, %v343
    %v345 = vpop.f32.mrb[0].mxu0
    %346 = vdwg.mxu0
    %347 = vst [vmem:[#allocation13] sm:$0xff] %v344
    // Predicated region
    $region38: #{tpu_custom_call.1} parent=1 // pred_check
      _
    $region39: #{tpu_custom_call.1} parent=1 // pred_check_branch
      %349 = sbr.rel (0) target = $region41
    $region40: #{tpu_custom_call.1} parent=1 // pred_region
      %s351 = ssub.s32 128, 128
      %352 = vsyncadd [#allocation4], %s351
      %s354 = sshll.u32 [#allocation10], 4
      %s355 = int_to_ptr.vmem [resolvable:$true] %s354
      %357 = dma.vmem_to_hbm [thread:$0]  %s355, 128, %s5, [#allocation4]
    $region41: #{tpu_custom_call.1} parent=1 // pred_fallthru
      _
    // Predicated region
    $region42: #{tpu_custom_call.1} parent=1 // pred_check
      _
    $region43: #{tpu_custom_call.1} parent=1 // pred_check_branch
      %359 = sbr.rel (0) target = $region45
    $region44: #{tpu_custom_call.1} parent=1 // pred_region
      %s361 = ssub.s32 128, 128
      %362 = vsyncadd [#allocation12], %s361
      %s364 = sshll.u32 [#allocation11], 4
      %s365 = int_to_ptr.vmem [resolvable:$true] %s364
      %367 = dma.vmem_to_hbm [thread:$0]  %s365, 128, %s6, [#allocation12]
    $region45: #{tpu_custom_call.1} parent=1 // pred_fallthru
      _
    // Predicated region
    $region46: #{tpu_custom_call.1} parent=1 // pred_check
      _
    $region47: #{tpu_custom_call.1} parent=1 // pred_check_branch
      %369 = sbr.rel (0) target = $region49
    $region48: #{tpu_custom_call.1} parent=1 // pred_region
      %s371 = ssub.s32 128, 128
      %372 = vsyncadd [#allocation12], %s371
      %s374 = sshll.u32 [#allocation13], 4
      %s375 = int_to_ptr.vmem [resolvable:$true] %s374
      %377 = dma.vmem_to_hbm [thread:$0]  %s375, 128, %s7, [#allocation12]
    $region49: #{tpu_custom_call.1} parent=1 // pred_fallthru
      _
    // Predicated region
    $region50: #{tpu_custom_call.1} parent=1 // pred_check
      _
    $region51: #{tpu_custom_call.1} parent=1 // pred_check_branch
      %379 = sbr.rel (0) target = $region53
    $region52: #{tpu_custom_call.1} parent=1 // pred_region
      %380 = dma.done [#allocation4], 128
    $region53: #{tpu_custom_call.1} parent=1 // pred_fallthru
      _
    // Predicated region
    $region54: #{tpu_custom_call.1} parent=1 // pred_check
      _
    $region55: #{tpu_custom_call.1} parent=1 // pred_check_branch
      %382 = sbr.rel (0) target = $region57
    $region56: #{tpu_custom_call.1} parent=1 // pred_region
      %383 = dma.done [#allocation12], 128
    $region57: #{tpu_custom_call.1} parent=1 // pred_fallthru
      _
    // Predicated region
    $region58: #{tpu_custom_call.1} parent=1 // pred_check
      _
    $region59: #{tpu_custom_call.1} parent=1 // pred_check_branch
      %385 = sbr.rel (0) target = $region61
    $region60: #{tpu_custom_call.1} parent=1 // pred_region
      %386 = dma.done [#allocation12], 128
    $region61: #{tpu_custom_call.1} parent=1 // pred_fallthru
      _
    %387 = vsyncpa [#allocation3], 1
    %388 = vsyncpa [#allocation6], 1
    %389 = vsyncpa [#allocation9], 1
    %390 = vsyncpa [#allocation4], 1
    %391 = vsyncpa [#allocation12], 1

</llo_original>
